<compile_context>
chip_gen: v7x
topology: tpu7x:2x2x1
jax: 0.10.0
libtpu: 0.0.40
codegen_flags: <defaults>
</compile_context>

<pallas_src>
import jax
import jax.numpy as jnp
from jax.experimental import pallas as pl
from jax.experimental.pallas import tpu as pltpu


def _round_up(x: int, m: int) -> int:
    return ((x + m - 1) // m) * m


def _make_fc_kernel(num_layers: int, apply_dropout: bool, reduce_last: bool):
    """Kernel closure for a fixed layer count / dropout config.

    Ref layout: (x, w0, b0, ..., w_{L-1}, b_{L-1}, [mask_0 .. mask_{L-2}], out)
    """
    num_hidden = num_layers - 1

    def kernel(*refs):
        x_ref = refs[0]
        out_ref = refs[-1]
        params = refs[1:1 + 2 * num_layers]
        masks = refs[1 + 2 * num_layers:-1] if apply_dropout else ()

        h = x_ref[...]  # bf16 (tile_rows, d)

        # Hidden layers: MXU matmul (bf16 in, f32 acc) -> ReLU -> keep-mask.
        for i in range(num_hidden):
            w = params[2 * i][...]                       # bf16 (in_i, out_i)
            b = params[2 * i + 1][...]                   # f32  (1, out_i)
            h = jnp.dot(h, w, preferred_element_type=jnp.float32) + b
            h = jnp.maximum(h, 0.0)                      # ReLU (VPU, f32)
            if apply_dropout:
                # Pure keep-mask multiply; the 1/(1-p) scale is pre-folded
                # into the next layer's weights.
                h = h * masks[i][...].astype(jnp.float32)
            h = h.astype(jnp.bfloat16)                   # back to MXU dtype

        w_last = params[2 * num_hidden][...]             # bf16
        b_last = params[2 * num_hidden + 1][...]         # f32 (1, out_last)
        if reduce_last:
            # Final layer has out_features == 1: VPU multiply + lane reduce
            # (w_last is pre-transposed to shape (1, in_last)).
            hf = h.astype(jnp.float32)
            out = jnp.sum(hf * w_last.astype(jnp.float32),
                          axis=-1, keepdims=True) + b_last
        else:
            out = jnp.dot(h, w_last, preferred_element_type=jnp.float32) + b_last
        out_ref[...] = out.astype(out_ref.dtype)

    return kernel


def fc_block2_forward(x, weights, biases, *, dropout_p=0.5, training=True,
                      rng_key=None, tile_n=512):
    """_FCBlock2 forward with one fused Pallas kernel call.

    Args:
      x:         (batch, d) or (batch, group, d) array.
      weights:   list of (in_i, out_i) arrays (transposed vs torch Linear).
      biases:    list of (out_i,) arrays.
      dropout_p: dropout probability (applied after every non-final layer).
      training:  apply dropout iff True (matches F.dropout default).
      rng_key:   jax PRNG key for the dropout masks.
      tile_n:    target row-tile size for large N.

    Returns:
      (batch, 1) or (batch, group, 1) float32 array.
    """
    weights = [jnp.asarray(w) for w in weights]
    biases = [jnp.asarray(b) for b in biases]
    num_layers = len(weights)
    out_dim = int(weights[-1].shape[1])

    orig_shape = x.shape
    d = orig_shape[-1]
    x2d = jnp.asarray(x).reshape(-1, d)
    n = x2d.shape[0]

    apply_dropout = bool(training) and dropout_p > 0.0 and num_layers > 1

    # Row tiling: large MXU-friendly tiles for big N, minimal padding for
    # small N.  Tiles are small (<< default 32 MiB scoped VMEM) even with the
    # weights resident, so the same tile size is safe on v5e/v6e/v7x.
    if n <= tile_n:
        tile_rows = _round_up(max(n, 8), 8)
    else:
        tile_rows = _round_up(tile_n, 256)
    n_pad = _round_up(n, tile_rows)
    num_tiles = n_pad // tile_rows

    if n_pad != n:
        x2d = jnp.pad(x2d, ((0, n_pad - n), (0, 0)))
    x_in = x2d.astype(jnp.bfloat16)

    # Fold the inverted-dropout scale into the weights that consume
    # dropped-out activations (layers 1 .. L-1).
    inv_keep = 1.0 / (1.0 - dropout_p) if apply_dropout else 1.0
    ws, bs = [], []
    for i, (w, b) in enumerate(zip(weights, biases)):
        wf = w.astype(jnp.float32)
        if apply_dropout and i > 0:
            wf = wf * jnp.float32(inv_keep)
        ws.append(wf)
        bs.append(b.reshape(1, -1).astype(jnp.float32))

    reduce_last = (out_dim == 1)
    if reduce_last:
        ws[-1] = ws[-1].T                      # (1, in_last) lane row
    ws = [w.astype(jnp.bfloat16) for w in ws]  # bf16 weights for the MXU

    # Per-hidden-layer keep masks (0/1), bf16, padded rows included.
    masks = []
    if apply_dropout:
        if rng_key is None:
            rng_key = jax.random.PRNGKey(0)
        keys = jax.random.split(rng_key, num_layers - 1)
        for i in range(num_layers - 1):
            hid = int(weights[i].shape[1])
            keep = jax.random.bernoulli(keys[i], 1.0 - dropout_p, (n_pad, hid))
            masks.append(keep.astype(jnp.bfloat16))

    # BlockSpecs: x / masks / out tiled over rows; weights & biases resident.
    in_specs = [pl.BlockSpec((tile_rows, d), lambda i: (i, 0))]
    operands = [x_in]
    for w, b in zip(ws, bs):
        in_specs.append(pl.BlockSpec(w.shape, lambda i: (0, 0)))
        operands.append(w)
        in_specs.append(pl.BlockSpec(b.shape, lambda i: (0, 0)))
        operands.append(b)
    for m in masks:
        in_specs.append(pl.BlockSpec((tile_rows, m.shape[1]), lambda i: (i, 0)))
        operands.append(m)

    out_spec = pl.BlockSpec((tile_rows, out_dim), lambda i: (i, 0))

    kernel = _make_fc_kernel(num_layers, apply_dropout, reduce_last)

    out = pl.pallas_call(
        kernel,
        out_shape=jax.ShapeDtypeStruct((n_pad, out_dim), jnp.float32),
        grid_spec=pltpu.PrefetchScalarGridSpec(
            num_scalar_prefetch=0,
            grid=(num_tiles,),
            in_specs=in_specs,
            out_specs=out_spec,
        ),
        compiler_params=pltpu.CompilerParams(
            # Row tiles are independent -> shard across the 2 TCs on v7x.
            dimension_semantics=("parallel",),
            # Explicit, generation-safe VMEM budget (our tiles are tiny).
            vmem_limit_bytes=32 * 1024 * 1024,
        ),
    )(*operands)

    out = out[:n]
    return out.reshape(orig_shape[:-1] + (out_dim,))


def init_fc_block2_params(key, in_features, units):
    """Deterministic parameter init mirroring _FCBlock2.__init__ shapes."""
    units = list(units)
    if units[-1] != 1:
        units = units + [1]
    in_feats = [in_features] + units[:-1]
    weights, biases = [], []
    for fin, fout in zip(in_feats, units):
        key, wk, bk = jax.random.split(key, 3)
        bound = 1.0 / float(fin) ** 0.5
        w = jax.random.uniform(wk, (fin, fout), jnp.float32, -bound, bound)
        b = jax.random.uniform(bk, (fout,), jnp.float32, -bound, bound)
        weights.append(w)
        biases.append(b)
    return weights, biases


if __name__ == "__main__":
    key = jax.random.PRNGKey(0)
    key, xk, pk, dk = jax.random.split(key, 4)

    batch, group, d = 2, 4, 32
    units = [64, 32, 16]          # module appends the final 1-unit layer

    x = jax.random.uniform(xk, (batch, group, d), jnp.float32)
    weights, biases = init_fc_block2_params(pk, d, units)

    out = fc_block2_forward(x, weights, biases, dropout_p=0.5,
                            training=True, rng_key=dk)
    out = jax.block_until_ready(out)

    assert out.shape == (batch, group, 1), out.shape
    assert bool(jnp.all(jnp.isfinite(out)))
    print("KERNEL_OK")
</pallas_src>

<mosaic_0001>
module attributes {stable_mosaic.version = 11 : i64} {
  func.func @kernel(%arg0: i32, %arg1: memref<8x32xbf16, #tpu.memory_space<vmem>>, %arg2: memref<32x64xbf16, #tpu.memory_space<vmem>>, %arg3: memref<1x64xf32, #tpu.memory_space<vmem>>, %arg4: memref<64x32xbf16, #tpu.memory_space<vmem>>, %arg5: memref<1x32xf32, #tpu.memory_space<vmem>>, %arg6: memref<32x16xbf16, #tpu.memory_space<vmem>>, %arg7: memref<1x16xf32, #tpu.memory_space<vmem>>, %arg8: memref<1x16xbf16, #tpu.memory_space<vmem>>, %arg9: memref<1x1xf32, #tpu.memory_space<vmem>>, %arg10: memref<8x64xbf16, #tpu.memory_space<vmem>>, %arg11: memref<8x32xbf16, #tpu.memory_space<vmem>>, %arg12: memref<8x16xbf16, #tpu.memory_space<vmem>>, %arg13: memref<8x1xf32, #tpu.memory_space<vmem>>) attributes {dimension_semantics = [#tpu.dimension_semantics<parallel>], iteration_bounds = array<i64: 1>, scalar_prefetch = 0 : i64, scratch_operands = 0 : i64, tpu.core_type = #tpu.core_type<tc>, window_params = [{transform_indices = @transform_0, window_bounds = array<i64: 8, 32>}, {pipeline_mode = #tpu.pipeline_mode<synchronous>, transform_indices = @transform_1, window_bounds = array<i64: 32, 64>}, {pipeline_mode = #tpu.pipeline_mode<synchronous>, transform_indices = @transform_2, window_bounds = array<i64: 1, 64>}, {pipeline_mode = #tpu.pipeline_mode<synchronous>, transform_indices = @transform_3, window_bounds = array<i64: 64, 32>}, {pipeline_mode = #tpu.pipeline_mode<synchronous>, transform_indices = @transform_4, window_bounds = array<i64: 1, 32>}, {pipeline_mode = #tpu.pipeline_mode<synchronous>, transform_indices = @transform_5, window_bounds = array<i64: 32, 16>}, {pipeline_mode = #tpu.pipeline_mode<synchronous>, transform_indices = @transform_6, window_bounds = array<i64: 1, 16>}, {pipeline_mode = #tpu.pipeline_mode<synchronous>, transform_indices = @transform_7, window_bounds = array<i64: 1, 16>}, {pipeline_mode = #tpu.pipeline_mode<synchronous>, transform_indices = @transform_8, window_bounds = array<i64: 1, 1>}, {transform_indices = @transform_9, window_bounds = array<i64: 8, 64>}, {transform_indices = @transform_10, window_bounds = array<i64: 8, 32>}, {transform_indices = @transform_11, window_bounds = array<i64: 8, 16>}, {transform_indices = @transform_12, window_bounds = array<i64: 8, 1>}]} {
    %c0 = arith.constant 0 : index
    %c0_0 = arith.constant 0 : index
    %0 = vector.load %arg1[%c0, %c0_0] : memref<8x32xbf16, #tpu.memory_space<vmem>>, vector<8x32xbf16>
    %c0_1 = arith.constant 0 : index
    %c0_2 = arith.constant 0 : index
    %1 = vector.load %arg2[%c0_1, %c0_2] : memref<32x64xbf16, #tpu.memory_space<vmem>>, vector<32x64xbf16>
    %c0_3 = arith.constant 0 : index
    %c0_4 = arith.constant 0 : index
    %2 = vector.load %arg3[%c0_3, %c0_4] : memref<1x64xf32, #tpu.memory_space<vmem>>, vector<1x64xf32>
    %cst = arith.constant dense<0.000000e+00> : vector<8x64xf32>
    %3 = tpu.matmul %0, %1, %cst {dimension_numbers = #tpu.dot_dimension_numbers<[1], [0], [0], [1], [0, 0, 1, 1], [], []>} : vector<8x32xbf16>, vector<32x64xbf16>, vector<8x64xf32> -> vector<8x64xf32>
    %4 = vector.broadcast %2 : vector<1x64xf32> to vector<8x64xf32>
    %5 = arith.addf %3, %4 : vector<8x64xf32>
    %cst_5 = arith.constant 0.000000e+00 : f32
    %6 = vector.broadcast %cst_5 : f32 to vector<8x64xf32>
    %7 = arith.maximumf %5, %6 : vector<8x64xf32>
    %c0_6 = arith.constant 0 : index
    %c0_7 = arith.constant 0 : index
    %8 = vector.load %arg10[%c0_6, %c0_7] : memref<8x64xbf16, #tpu.memory_space<vmem>>, vector<8x64xbf16>
    %9 = arith.extf %8 : vector<8x64xbf16> to vector<8x64xf32>
    %10 = arith.mulf %7, %9 : vector<8x64xf32>
    %11 = arith.truncf %10 : vector<8x64xf32> to vector<8x64xbf16>
    %c0_8 = arith.constant 0 : index
    %c0_9 = arith.constant 0 : index
    %12 = vector.load %arg4[%c0_8, %c0_9] : memref<64x32xbf16, #tpu.memory_space<vmem>>, vector<64x32xbf16>
    %c0_10 = arith.constant 0 : index
    %c0_11 = arith.constant 0 : index
    %13 = vector.load %arg5[%c0_10, %c0_11] : memref<1x32xf32, #tpu.memory_space<vmem>>, vector<1x32xf32>
    %cst_12 = arith.constant dense<0.000000e+00> : vector<8x32xf32>
    %14 = tpu.matmul %11, %12, %cst_12 {dimension_numbers = #tpu.dot_dimension_numbers<[1], [0], [0], [1], [0, 0, 1, 1], [], []>} : vector<8x64xbf16>, vector<64x32xbf16>, vector<8x32xf32> -> vector<8x32xf32>
    %15 = vector.broadcast %13 : vector<1x32xf32> to vector<8x32xf32>
    %16 = arith.addf %14, %15 : vector<8x32xf32>
    %cst_13 = arith.constant 0.000000e+00 : f32
    %17 = vector.broadcast %cst_13 : f32 to vector<8x32xf32>
    %18 = arith.maximumf %16, %17 : vector<8x32xf32>
    %c0_14 = arith.constant 0 : index
    %c0_15 = arith.constant 0 : index
    %19 = vector.load %arg11[%c0_14, %c0_15] : memref<8x32xbf16, #tpu.memory_space<vmem>>, vector<8x32xbf16>
    %20 = arith.extf %19 : vector<8x32xbf16> to vector<8x32xf32>
    %21 = arith.mulf %18, %20 : vector<8x32xf32>
    %22 = arith.truncf %21 : vector<8x32xf32> to vector<8x32xbf16>
    %c0_16 = arith.constant 0 : index
    %c0_17 = arith.constant 0 : index
    %23 = vector.load %arg6[%c0_16, %c0_17] : memref<32x16xbf16, #tpu.memory_space<vmem>>, vector<32x16xbf16>
    %c0_18 = arith.constant 0 : index
    %c0_19 = arith.constant 0 : index
    %24 = vector.load %arg7[%c0_18, %c0_19] : memref<1x16xf32, #tpu.memory_space<vmem>>, vector<1x16xf32>
    %cst_20 = arith.constant dense<0.000000e+00> : vector<8x16xf32>
    %25 = tpu.matmul %22, %23, %cst_20 {dimension_numbers = #tpu.dot_dimension_numbers<[1], [0], [0], [1], [0, 0, 1, 1], [], []>} : vector<8x32xbf16>, vector<32x16xbf16>, vector<8x16xf32> -> vector<8x16xf32>
    %26 = vector.broadcast %24 : vector<1x16xf32> to vector<8x16xf32>
    %27 = arith.addf %25, %26 : vector<8x16xf32>
    %cst_21 = arith.constant 0.000000e+00 : f32
    %28 = vector.broadcast %cst_21 : f32 to vector<8x16xf32>
    %29 = arith.maximumf %27, %28 : vector<8x16xf32>
    %c0_22 = arith.constant 0 : index
    %c0_23 = arith.constant 0 : index
    %30 = vector.load %arg12[%c0_22, %c0_23] : memref<8x16xbf16, #tpu.memory_space<vmem>>, vector<8x16xbf16>
    %31 = arith.extf %30 : vector<8x16xbf16> to vector<8x16xf32>
    %32 = arith.mulf %29, %31 : vector<8x16xf32>
    %33 = arith.truncf %32 : vector<8x16xf32> to vector<8x16xbf16>
    %c0_24 = arith.constant 0 : index
    %c0_25 = arith.constant 0 : index
    %34 = vector.load %arg8[%c0_24, %c0_25] : memref<1x16xbf16, #tpu.memory_space<vmem>>, vector<1x16xbf16>
    %c0_26 = arith.constant 0 : index
    %c0_27 = arith.constant 0 : index
    %35 = vector.load %arg9[%c0_26, %c0_27] : memref<1x1xf32, #tpu.memory_space<vmem>>, vector<1x1xf32>
    %36 = arith.extf %33 : vector<8x16xbf16> to vector<8x16xf32>
    %37 = arith.extf %34 : vector<1x16xbf16> to vector<1x16xf32>
    %38 = vector.broadcast %37 : vector<1x16xf32> to vector<8x16xf32>
    %39 = arith.mulf %36, %38 : vector<8x16xf32>
    %cst_28 = arith.constant dense<0.000000e+00> : vector<8xf32>
    %40 = vector.multi_reduction <add>, %39, %cst_28 [1] : vector<8x16xf32> to vector<8xf32>
    %41 = vector.shape_cast %40 : vector<8xf32> to vector<8x1xf32>
    %42 = vector.broadcast %35 : vector<1x1xf32> to vector<8x1xf32>
    %43 = arith.addf %41, %42 : vector<8x1xf32>
    %c0_29 = arith.constant 0 : index
    %c0_30 = arith.constant 0 : index
    %44 = vector.load %arg13[%c0_29, %c0_30] : memref<8x1xf32, #tpu.memory_space<vmem>>, vector<8x1xf32>
    tpu.vector_store %arg13[%c0_29, %c0_30], %43 {strides = array<i32>} : memref<8x1xf32, #tpu.memory_space<vmem>>, vector<8x1xf32>,
    return
  }
  func.func @transform_0(%arg0: i32) -> (i32, i32) {
    %c0_i32 = arith.constant 0 : i32
    %c0_i32_0 = arith.constant 0 : i32
    return %arg0, %c0_i32 : i32, i32
  }
  func.func @transform_1(%arg0: i32) -> (i32, i32) {
    %c0_i32 = arith.constant 0 : i32
    %c0_i32_0 = arith.constant 0 : i32
    %c0_i32_1 = arith.constant 0 : i32
    return %c0_i32, %c0_i32_0 : i32, i32
  }
  func.func @transform_2(%arg0: i32) -> (i32, i32) {
    %c0_i32 = arith.constant 0 : i32
    %c0_i32_0 = arith.constant 0 : i32
    %c0_i32_1 = arith.constant 0 : i32
    return %c0_i32, %c0_i32_0 : i32, i32
  }
  func.func @transform_3(%arg0: i32) -> (i32, i32) {
    %c0_i32 = arith.constant 0 : i32
    %c0_i32_0 = arith.constant 0 : i32
    %c0_i32_1 = arith.constant 0 : i32
    return %c0_i32, %c0_i32_0 : i32, i32
  }
  func.func @transform_4(%arg0: i32) -> (i32, i32) {
    %c0_i32 = arith.constant 0 : i32
    %c0_i32_0 = arith.constant 0 : i32
    %c0_i32_1 = arith.constant 0 : i32
    return %c0_i32, %c0_i32_0 : i32, i32
  }
  func.func @transform_5(%arg0: i32) -> (i32, i32) {
    %c0_i32 = arith.constant 0 : i32
    %c0_i32_0 = arith.constant 0 : i32
    %c0_i32_1 = arith.constant 0 : i32
    return %c0_i32, %c0_i32_0 : i32, i32
  }
  func.func @transform_6(%arg0: i32) -> (i32, i32) {
    %c0_i32 = arith.constant 0 : i32
    %c0_i32_0 = arith.constant 0 : i32
    %c0_i32_1 = arith.constant 0 : i32
    return %c0_i32, %c0_i32_0 : i32, i32
  }
  func.func @transform_7(%arg0: i32) -> (i32, i32) {
    %c0_i32 = arith.constant 0 : i32
    %c0_i32_0 = arith.constant 0 : i32
    %c0_i32_1 = arith.constant 0 : i32
    return %c0_i32, %c0_i32_0 : i32, i32
  }
  func.func @transform_8(%arg0: i32) -> (i32, i32) {
    %c0_i32 = arith.constant 0 : i32
    %c0_i32_0 = arith.constant 0 : i32
    %c0_i32_1 = arith.constant 0 : i32
    return %c0_i32, %c0_i32_0 : i32, i32
  }
  func.func @transform_9(%arg0: i32) -> (i32, i32) {
    %c0_i32 = arith.constant 0 : i32
    %c0_i32_0 = arith.constant 0 : i32
    return %arg0, %c0_i32 : i32, i32
  }
  func.func @transform_10(%arg0: i32) -> (i32, i32) {
    %c0_i32 = arith.constant 0 : i32
    %c0_i32_0 = arith.constant 0 : i32
    return %arg0, %c0_i32 : i32, i32
  }
  func.func @transform_11(%arg0: i32) -> (i32, i32) {
    %c0_i32 = arith.constant 0 : i32
    %c0_i32_0 = arith.constant 0 : i32
    return %arg0, %c0_i32 : i32, i32
  }
  func.func @transform_12(%arg0: i32) -> (i32, i32) {
    %c0_i32 = arith.constant 0 : i32
    %c0_i32_0 = arith.constant 0 : i32
    return %arg0, %c0_i32 : i32, i32
  }
}

</mosaic_0001>

<llo_original>
// kernel: tpu_custom_call.1
$region0: #{tpu_custom_call.1}
  #allocation0 [shape = 'u32[]', space=smem, size = 0x4, offset = 0x4, fixed_abs, tag = 'smem constant byte address 0x4 - core index']
  #allocation1 [shape = 'u32[144,128]{1,0:T(1,128)}', space=vmem, size = 0x12000, scoped, tag = 'internal scratch']
  #allocation2 [shape = 'f32[1,1]{1,0:T(1,128)S(1)}', space=vmem, size = 0x200, scoped, tag = 'scoped memory for tpu_custom_call.1']
  %s0 = inlined_call_operand.vmem [shape: bf16[8,32], index: 0, kind: input, shape index: {}]
  %s1 = inlined_call_operand.vmem [shape: bf16[32,64], index: 1, kind: input, shape index: {}]
  %s2 = inlined_call_operand.vmem [shape: f32[1,64], index: 2, kind: input, shape index: {}]
  %s3 = inlined_call_operand.vmem [shape: bf16[64,32], index: 3, kind: input, shape index: {}]
  %s4 = inlined_call_operand.vmem [shape: f32[1,32], index: 4, kind: input, shape index: {}]
  %s5 = inlined_call_operand.vmem [shape: bf16[32,16], index: 5, kind: input, shape index: {}]
  %s6 = inlined_call_operand.vmem [shape: f32[1,16], index: 6, kind: input, shape index: {}]
  %s7 = inlined_call_operand.vmem [shape: bf16[1,16], index: 7, kind: input, shape index: {}]
  %s8 = inlined_call_operand.<no memory space> [shape: f32[1,1], index: 8, kind: input, shape index: {}]
  %s9 = inlined_call_operand.vmem [shape: bf16[8,64], index: 9, kind: input, shape index: {}]
  %s10 = inlined_call_operand.vmem [shape: bf16[8,32], index: 10, kind: input, shape index: {}]
  %s11 = inlined_call_operand.vmem [shape: bf16[8,16], index: 11, kind: input, shape index: {}]
  %s12 = inlined_call_operand.vmem [shape: f32[8,1], index: 12, kind: output, shape index: {}]
  %s13 = sld [smem:[#allocation0]]
  $region58: #{tpu_custom_call.1} parent=0
    _
  %s15 = ssub.s32 1, %s13
  %s16 = scalar_select 0, %s15, %s13
  %v17 = vstv %s8
  %18 = vst [vmem:[#allocation2] sm:$0x1] %v17
  // Predicated region
  $region2: #{tpu_custom_call.1} parent=0 // pred_check
    _
  $region3: #{tpu_custom_call.1} parent=0 // pred_check_branch
    %20 = sbr.rel (0) target = $region5
  $region4: #{tpu_custom_call.1} parent=0 // pred_region
    _
  $region5: #{tpu_custom_call.1} parent=0 // pred_fallthru
    _
  // Predicated region
  $region6: #{tpu_custom_call.1} parent=0 // pred_check
    _
  $region7: #{tpu_custom_call.1} parent=0 // pred_check_branch
    %22 = sbr.rel (0) target = $region9
  $region8: #{tpu_custom_call.1} parent=0 // pred_region
    _
  $region9: #{tpu_custom_call.1} parent=0 // pred_fallthru
    _
  // Predicated region
  $region10: #{tpu_custom_call.1} parent=0 // pred_check
    _
  $region11: #{tpu_custom_call.1} parent=0 // pred_check_branch
    %24 = sbr.rel (0) target = $region13
  $region12: #{tpu_custom_call.1} parent=0 // pred_region
    _
  $region13: #{tpu_custom_call.1} parent=0 // pred_fallthru
    _
  // Predicated region
  $region14: #{tpu_custom_call.1} parent=0 // pred_check
    _
  $region15: #{tpu_custom_call.1} parent=0 // pred_check_branch
    %26 = sbr.rel (0) target = $region17
  $region16: #{tpu_custom_call.1} parent=0 // pred_region
    _
  $region17: #{tpu_custom_call.1} parent=0 // pred_fallthru
    _
  // Predicated region
  $region18: #{tpu_custom_call.1} parent=0 // pred_check
    _
  $region19: #{tpu_custom_call.1} parent=0 // pred_check_branch
    %28 = sbr.rel (0) target = $region21
  $region20: #{tpu_custom_call.1} parent=0 // pred_region
    _
  $region21: #{tpu_custom_call.1} parent=0 // pred_fallthru
    _
  // Predicated region
  $region22: #{tpu_custom_call.1} parent=0 // pred_check
    _
  $region23: #{tpu_custom_call.1} parent=0 // pred_check_branch
    %30 = sbr.rel (0) target = $region25
  $region24: #{tpu_custom_call.1} parent=0 // pred_region
    _
  $region25: #{tpu_custom_call.1} parent=0 // pred_fallthru
    _
  // Predicated region
  $region26: #{tpu_custom_call.1} parent=0 // pred_check
    _
  $region27: #{tpu_custom_call.1} parent=0 // pred_check_branch
    %32 = sbr.rel (0) target = $region29
  $region28: #{tpu_custom_call.1} parent=0 // pred_region
    _
  $region29: #{tpu_custom_call.1} parent=0 // pred_fallthru
    _
  // Predicated region
  $region30: #{tpu_custom_call.1} parent=0 // pred_check
    _
  $region31: #{tpu_custom_call.1} parent=0 // pred_check_branch
    %34 = sbr.rel (0) target = $region33
  $region32: #{tpu_custom_call.1} parent=0 // pred_region
    _
  $region33: #{tpu_custom_call.1} parent=0 // pred_fallthru
    _
  // Predicated region
  $region34: #{tpu_custom_call.1} parent=0 // pred_check
    _
  $region35: #{tpu_custom_call.1} parent=0 // pred_check_branch
    %36 = sbr.rel (0) target = $region37
  $region36: #{tpu_custom_call.1} parent=0 // pred_region
    _
  $region37: #{tpu_custom_call.1} parent=0 // pred_fallthru
    _
  // Predicated region
  $region38: #{tpu_custom_call.1} parent=0 // pred_check
    _
  $region39: #{tpu_custom_call.1} parent=0 // pred_check_branch
    %38 = sbr.rel (0) target = $region41
  $region40: #{tpu_custom_call.1} parent=0 // pred_region
    _
  $region41: #{tpu_custom_call.1} parent=0 // pred_fallthru
    _
  // Predicated region
  $region42: #{tpu_custom_call.1} parent=0 // pred_check
    _
  $region43: #{tpu_custom_call.1} parent=0 // pred_check_branch
    %40 = sbr.rel (0) target = $region45
  $region44: #{tpu_custom_call.1} parent=0 // pred_region
    _
  $region45: #{tpu_custom_call.1} parent=0 // pred_fallthru
    _
  // Predicated region
  $region46: #{tpu_custom_call.1} parent=0 // pred_check
    _
  $region47: #{tpu_custom_call.1} parent=0 // pred_check_branch
    %42 = sbr.rel (0) target = $region49
  $region48: #{tpu_custom_call.1} parent=0 // pred_region
    _
  $region49: #{tpu_custom_call.1} parent=0 // pred_fallthru
    _
  %v44 = vld [vmem:[%s0] sm:$0xf]
  %v45 = vld [vmem:[%s1] sm:$0xf]
  %v46 = vld [vmem:[%s1 + $0x4] sm:$0xf]
  %v47 = vld [vmem:[%s1 + $0x8] sm:$0xf]
  %v48 = vld [vmem:[%s1 + $0xc] sm:$0xf]
  %v49 = vld [vmem:[%s2] sm:$0x1]
  %v51 = vlaneseq
  %v52 = vshrl.u32 %v51, 7
  %v53 = vsub.s32 0, %v52
  %v54 = vrot.slane %v49, %v53
  %v60 = vunpack.c.l.b16 %v45
  %v61 = vunpack.c.l.b16 %v46
  %v62 = vunpack.c.l.b16 %v47
  %v63 = vunpack.c.l.b16 %v48
  %v64 = vpack.c.b16 %v61, %v60
  %v65 = vpack.c.b16 %v63, %v62
  %vm68 = vcmask 261120
  %v70 = vsel %vm68, %v44, 0
  %72 = vmatprep.subr.bf16.mxu0 0
  %73 = vmatpush1.bf16.msra.mxu0 %v64
  %74 = vmatprep.subr.bf16.mxu0 0
  %75 = vmatpush1.bf16.msra.mxu0 %v65
  %76 = vmatprep.subr.bf16.mxu0 0
  %77 = vmatpush1.bf16.msra.mxu0 0
  %78 = vmatprep.subr.bf16.mxu0 0
  %79 = vmatpush1.bf16.msra.mxu0 0
  %80 = vmatprep.subr.bf16.mxu0 0
  %81 = vmatpush1.bf16.msra.mxu0 0
  %82 = vmatprep.subr.bf16.mxu0 0
  %83 = vmatpush1.bf16.msra.mxu0 0
  %84 = vmatprep.subr.bf16.mxu0 0
  %85 = vmatpush1.bf16.msra.mxu0 0
  %86 = vmatprep.subr.bf16.mxu0 0
  %87 = vmatpush1.bf16.msra.mxu0 0
  %88 = vmatprep.subr.bf16.mxu0 0
  %89 = vmatpush1.bf16.msra.mxu0 0
  %90 = vmatprep.subr.bf16.mxu0 0
  %91 = vmatpush1.bf16.msra.mxu0 0
  %92 = vmatprep.subr.bf16.mxu0 0
  %93 = vmatpush1.bf16.msra.mxu0 0
  %94 = vmatprep.subr.bf16.mxu0 0
  %95 = vmatpush1.bf16.msra.mxu0 0
  %96 = vmatprep.subr.bf16.mxu0 0
  %97 = vmatpush1.bf16.msra.mxu0 0
  %98 = vmatprep.subr.bf16.mxu0 0
  %99 = vmatpush1.bf16.msra.mxu0 0
  %100 = vmatprep.subr.bf16.mxu0 0
  %101 = vmatpush1.bf16.msra.mxu0 0
  %102 = vmatprep.subr.bf16.mxu0 0
  %103 = vmatpush1.bf16.msra.mxu0 0
  %104 = vmatprep.mubr.bf16.mxu0 0
  %105 = vmatmul.mubr.bf16.gmra.mrb[0].mxu0 %v70
  %v106 = vpop.f32.mrb[0].mxu0
  %v107 = vadd.f32 %v54, %v106
  %v108 = vpop.f32.mrb[0].mxu0
  %v109 = vpop.f32.mrb[0].mxu0
  %v110 = vpop.f32.mrb[0].mxu0
  %111 = vdwg.mxu0
  %v112 = vmax.f32 %v107, 0.0
  %v113 = vld [vmem:[%s9] sm:$0xf]
  %v114 = vunpack.c.l.bf16 %v113
  %v115 = vmul.f32 %v112, %v114
  %v116 = vpack.c.bf16 %v115, %v115
  %v117 = vld [vmem:[%s3] sm:$0xf]
  %v118 = vld [vmem:[%s3 + $0x4] sm:$0xf]
  %v119 = vld [vmem:[%s3 + $0x8] sm:$0xf]
  %v120 = vld [vmem:[%s3 + $0xc] sm:$0xf]
  %v121 = vld [vmem:[%s3 + $0x10] sm:$0xf]
  %v122 = vld [vmem:[%s3 + $0x14] sm:$0xf]
  %v123 = vld [vmem:[%s3 + $0x18] sm:$0xf]
  %v124 = vld [vmem:[%s3 + $0x1c] sm:$0xf]
  %v125 = vld [vmem:[%s4] sm:$0x1]
  %v127 = vlaneseq
  %v128 = vshrl.u32 %v127, 7
  %v129 = vsub.s32 0, %v128
  %v130 = vrot.slane %v125, %v129
  %v140 = vunpack.c.l.b16 %v117
  %v141 = vunpack.c.l.b16 %v118
  %v142 = vunpack.c.l.b16 %v119
  %v143 = vunpack.c.l.b16 %v120
  %v144 = vunpack.c.l.b16 %v121
  %v145 = vunpack.c.l.b16 %v122
  %v146 = vunpack.c.l.b16 %v123
  %v147 = vunpack.c.l.b16 %v124
  %v148 = vpack.c.b16 %v141, %v140
  %v149 = vpack.c.b16 %v143, %v142
  %v150 = vpack.c.b16 %v145, %v144
  %v151 = vpack.c.b16 %v147, %v146
  %vm156 = vcmask 523264
  %v158 = vsel %vm156, %v116, 0
  %160 = vmatprep.subr.bf16.mxu0 0
  %161 = vmatpush1.bf16.msra.mxu0 %v148
  %162 = vmatprep.subr.bf16.mxu0 0
  %163 = vmatpush1.bf16.msra.mxu0 %v149
  %164 = vmatprep.subr.bf16.mxu0 0
  %165 = vmatpush1.bf16.msra.mxu0 %v150
  %166 = vmatprep.subr.bf16.mxu0 0
  %167 = vmatpush1.bf16.msra.mxu0 %v151
  %168 = vmatprep.subr.bf16.mxu0 0
  %169 = vmatpush1.bf16.msra.mxu0 0
  %170 = vmatprep.subr.bf16.mxu0 0
  %171 = vmatpush1.bf16.msra.mxu0 0
  %172 = vmatprep.subr.bf16.mxu0 0
  %173 = vmatpush1.bf16.msra.mxu0 0
  %174 = vmatprep.subr.bf16.mxu0 0
  %175 = vmatpush1.bf16.msra.mxu0 0
  %176 = vmatprep.subr.bf16.mxu0 0
  %177 = vmatpush1.bf16.msra.mxu0 0
  %178 = vmatprep.subr.bf16.mxu0 0
  %179 = vmatpush1.bf16.msra.mxu0 0
  %180 = vmatprep.subr.bf16.mxu0 0
  %181 = vmatpush1.bf16.msra.mxu0 0
  %182 = vmatprep.subr.bf16.mxu0 0
  %183 = vmatpush1.bf16.msra.mxu0 0
  %184 = vmatprep.subr.bf16.mxu0 0
  %185 = vmatpush1.bf16.msra.mxu0 0
  %186 = vmatprep.subr.bf16.mxu0 0
  %187 = vmatpush1.bf16.msra.mxu0 0
  %188 = vmatprep.subr.bf16.mxu0 0
  %189 = vmatpush1.bf16.msra.mxu0 0
  %190 = vmatprep.subr.bf16.mxu0 0
  %191 = vmatpush1.bf16.msra.mxu0 0
  %192 = vmatprep.mubr.bf16.mxu0 0
  %193 = vmatmul.mubr.bf16.gmra.mrb[0].mxu0 %v158
  %v194 = vpop.f32.mrb[0].mxu0
  %v195 = vadd.f32 %v130, %v194
  %v196 = vpop.f32.mrb[0].mxu0
  %v197 = vpop.f32.mrb[0].mxu0
  %v198 = vpop.f32.mrb[0].mxu0
  %199 = vdwg.mxu0
  %v200 = vmax.f32 %v195, 0.0
  %v201 = vld [vmem:[%s10] sm:$0xf]
  %v202 = vunpack.c.l.bf16 %v201
  %v203 = vmul.f32 %v200, %v202
  %v204 = vpack.c.bf16 %v203, %v203
  %v205 = vld [vmem:[%s5] sm:$0xf]
  %v206 = vld [vmem:[%s5 + $0x4] sm:$0xf]
  %v207 = vld [vmem:[%s5 + $0x8] sm:$0xf]
  %v208 = vld [vmem:[%s5 + $0xc] sm:$0xf]
  %v209 = vld [vmem:[%s6] sm:$0x1]
  %v211 = vlaneseq
  %v212 = vshrl.u32 %v211, 7
  %v213 = vsub.s32 0, %v212
  %v214 = vrot.slane %v209, %v213
  %v220 = vunpack.c.l.b16 %v205
  %v221 = vunpack.c.l.b16 %v206
  %v222 = vunpack.c.l.b16 %v207
  %v223 = vunpack.c.l.b16 %v208
  %v224 = vpack.c.b16 %v221, %v220
  %v225 = vpack.c.b16 %v223, %v222
  %v229 = vsel %vm68, %v204, 0
  %231 = vmatprep.subr.bf16.mxu0 0
  %232 = vmatpush1.bf16.msra.mxu0 %v224
  %233 = vmatprep.subr.bf16.mxu0 0
  %234 = vmatpush1.bf16.msra.mxu0 %v225
  %235 = vmatprep.subr.bf16.mxu0 0
  %236 = vmatpush1.bf16.msra.mxu0 0
  %237 = vmatprep.subr.bf16.mxu0 0
  %238 = vmatpush1.bf16.msra.mxu0 0
  %239 = vmatprep.subr.bf16.mxu0 0
  %240 = vmatpush1.bf16.msra.mxu0 0
  %241 = vmatprep.subr.bf16.mxu0 0
  %242 = vmatpush1.bf16.msra.mxu0 0
  %243 = vmatprep.subr.bf16.mxu0 0
  %244 = vmatpush1.bf16.msra.mxu0 0
  %245 = vmatprep.subr.bf16.mxu0 0
  %246 = vmatpush1.bf16.msra.mxu0 0
  %247 = vmatprep.subr.bf16.mxu0 0
  %248 = vmatpush1.bf16.msra.mxu0 0
  %249 = vmatprep.subr.bf16.mxu0 0
  %250 = vmatpush1.bf16.msra.mxu0 0
  %251 = vmatprep.subr.bf16.mxu0 0
  %252 = vmatpush1.bf16.msra.mxu0 0
  %253 = vmatprep.subr.bf16.mxu0 0
  %254 = vmatpush1.bf16.msra.mxu0 0
  %255 = vmatprep.subr.bf16.mxu0 0
  %256 = vmatpush1.bf16.msra.mxu0 0
  %257 = vmatprep.subr.bf16.mxu0 0
  %258 = vmatpush1.bf16.msra.mxu0 0
  %259 = vmatprep.subr.bf16.mxu0 0
  %260 = vmatpush1.bf16.msra.mxu0 0
  %261 = vmatprep.subr.bf16.mxu0 0
  %262 = vmatpush1.bf16.msra.mxu0 0
  %263 = vmatprep.mubr.bf16.mxu0 0
  %264 = vmatmul.mubr.bf16.gmra.mrb[0].mxu0 %v229
  %v265 = vpop.f32.mrb[0].mxu0
  %v266 = vadd.f32 %v214, %v265
  %v267 = vpop.f32.mrb[0].mxu0
  %v268 = vpop.f32.mrb[0].mxu0
  %v269 = vpop.f32.mrb[0].mxu0
  %270 = vdwg.mxu0
  %v271 = vmax.f32 %v266, 0.0
  %v272 = vld [vmem:[%s11] sm:$0xf]
  %v273 = vunpack.c.l.bf16 %v272
  %v274 = vmul.f32 %v271, %v273
  %v275 = vpack.c.bf16 %v274, %v274
  %v276 = vld [vmem:[%s7] sm:$0x1]
  %v277 = vld [vmem:[#allocation2] sm:$0x1]
  %v278 = vunpack.c.l.bf16 %v275
  %v279 = vunpack.c.l.bf16 %v276
  %v280 = vlaneseq
  %v281 = vshrl.u32 %v280, 7
  %v282 = vsub.s32 0, %v281
  %v283 = vrot.slane %v279, %v282
  %v284 = vmul.f32 %v278, %v283
  %vm285 = vcmask 130048
  %v286 = vsel %vm285, %v284, 0.0
  %287 = vadd.xlane.f32.xlu0 %v286
  %v288 = vpop.xlane.xlu0 %287
  %v290 = vlaneseq
  %v291 = vshrl.u32 %v290, 7
  %v292 = vsub.s32 0, %v291
  %v293 = vrot.slane %v277, %v292
  %v295 = vadd.f32 %v288, %v293
  %vm296 = vcmask 7168
  %297 = vst.msk [vmem:[%s12] sm:$0xff] %vm296, %v295
  // Predicated region
  $region50: #{tpu_custom_call.1} parent=0 // pred_check
    _
  $region51: #{tpu_custom_call.1} parent=0 // pred_check_branch
    %299 = sbr.rel (0) target = $region53
  $region52: #{tpu_custom_call.1} parent=0 // pred_region
    _
  $region53: #{tpu_custom_call.1} parent=0 // pred_fallthru
    _
  // Predicated region
  $region54: #{tpu_custom_call.1} parent=0 // pred_check
    _
  $region55: #{tpu_custom_call.1} parent=0 // pred_check_branch
    %301 = sbr.rel (0) target = $region57
  $region56: #{tpu_custom_call.1} parent=0 // pred_region
    _
  $region57: #{tpu_custom_call.1} parent=0 // pred_fallthru
    _

</llo_original>
